<compile_context>
chip_gen: v7x
topology: tpu7x:2x2x1
jax: 0.10.0
libtpu: 0.0.40
codegen_flags: <defaults>
</compile_context>

<pallas_src>
import functools

import jax
import jax.numpy as jnp
from jax import lax
from jax.experimental import pallas as pl
from jax.experimental.pallas import tpu as pltpu


def _online_softmax_update(q, k_ref, v_ref, m_sc, l_sc, acc_sc, mask):
    """Add one k-tile's contribution to the streaming-softmax accumulators."""
    # Q @ K^T: contract D of both operands (no explicit transpose / XLU work).
    s = lax.dot_general(q, k_ref[...], (((1,), (1,)), ((), ())),
                        preferred_element_type=jnp.float32)      # (tq, tk) f32
    if mask is not None:
        col, vlen = mask            # col: (1, tk) int32, vlen: int32 scalar
        # Strict '>' like the PyTorch module; (1, tk) condition broadcasts.
        s = jnp.where(col > vlen, jnp.float32(-1e6), s)

    m_prev = m_sc[...]
    m_new = jnp.maximum(m_prev, jnp.max(s, axis=-1, keepdims=True))
    alpha = jnp.exp(m_prev - m_new)
    p = jnp.exp(s - m_new)                                       # f32 probs
    l_sc[...] = alpha * l_sc[...] + jnp.sum(p, axis=-1, keepdims=True)
    acc_sc[...] = alpha * acc_sc[...] + lax.dot_general(
        p.astype(v_ref.dtype), v_ref[...], (((1,), (0,)), ((), ())),
        preferred_element_type=jnp.float32)
    m_sc[...] = m_new


def _flash_step(vl_ref, q_ref, k_ref, v_ref, o_ref,
                m_sc, l_sc, acc_sc, qs_sc, *, scale, tk, approx_recip):
    """One (batch, q-tile, k-tile) grid step of flash-style attention."""
    ki = pl.program_id(2)

    @pl.when(ki == 0)
    def _init():
        m_sc[...] = jnp.full(m_sc.shape, -jnp.inf, dtype=m_sc.dtype)
        l_sc[...] = jnp.zeros(l_sc.shape, dtype=l_sc.dtype)
        acc_sc[...] = jnp.zeros(acc_sc.shape, dtype=acc_sc.dtype)
        # Hoisted Q scaling: the Q block is resident across the k axis, so
        # pay the tq x D VPU multiply once per q-tile, not once per k-step.
        qs_sc[...] = q_ref[...] * scale

    q = qs_sc[...]

    if vl_ref is None:
        _online_softmax_update(q, k_ref, v_ref, m_sc, l_sc, acc_sc, None)
    else:
        vlen = vl_ref[pl.program_id(0)]

        # Skip fully-masked k-tiles entirely (their contribution is exactly 0
        # since exp(-1e6 - m) flushes to 0 in f32). ki == 0 is never skipped
        # for valid_len >= 0, so the accumulators are always initialized.
        @pl.when(ki * tk <= vlen)
        def _compute():
            col = ki * tk + lax.broadcasted_iota(jnp.int32, (1, tk), 1)
            _online_softmax_update(q, k_ref, v_ref, m_sc, l_sc, acc_sc,
                                   (col, vlen))

    @pl.when(ki == pl.num_programs(2) - 1)
    def _finalize():
        o_ref[...] = (acc_sc[...] *
                      pl.reciprocal(l_sc[...], approx=approx_recip)
                      ).astype(o_ref.dtype)


def _kernel_nomask(q_ref, k_ref, v_ref, o_ref, m_sc, l_sc, acc_sc, qs_sc, *,
                   scale, tk, approx_recip):
    _flash_step(None, q_ref, k_ref, v_ref, o_ref, m_sc, l_sc, acc_sc, qs_sc,
                scale=scale, tk=tk, approx_recip=approx_recip)


def _kernel_masked(vl_ref, q_ref, k_ref, v_ref, o_ref, m_sc, l_sc, acc_sc,
                   qs_sc, *, scale, tk, approx_recip):
    _flash_step(vl_ref, q_ref, k_ref, v_ref, o_ref, m_sc, l_sc, acc_sc, qs_sc,
                scale=scale, tk=tk, approx_recip=approx_recip)


def _pick_tile(S, pref):
    """Largest tile <= pref that divides S (>=128), else full sequence."""
    if S <= pref:
        return S
    t = pref
    while t >= 128:
        if S % t == 0:
            return t
        t //= 2
    return S


def _vmem_limit_bytes(tq, tk, D, in_itemsize, out_itemsize, kv_buffers):
    """Rough VMEM footprint estimate -> explicit scoped-VMEM request."""
    blocks = 2 * tq * D * in_itemsize                  # Q (double-buffered)
    blocks += 2 * kv_buffers * tk * D * in_itemsize    # K and V blocks
    blocks += 2 * tq * D * out_itemsize                # output block
    scratch = tq * D * 4 + tq * D * in_itemsize + 2 * tq * 128 * 4
    temps = 4 * tq * tk * 4                            # live (tq, tk) f32 temps
    est = blocks + scratch + temps
    # Never request more than v7x's 64 MiB physical VMEM; floor at 32 MiB.
    return int(min(max(32 << 20, 2 * est), 64 << 20))


def dot_att(K, V, Q, valid_len=None, *, tq=512, tk=1024,
            compute_dtype=None, kv_buffers=2):
    """Pallas implementation of DotAtt.forward(K, V, Q, valid_len).

    K, V, Q: (B, S, D) arrays. valid_len: optional (B,) int array; columns with
    index > valid_len[b] are masked with -1e6 before softmax (strict '>').
    compute_dtype: cast operands (e.g. jnp.bfloat16 fast path); accumulation is
    f32 and the output keeps the original input dtype.
    kv_buffers: pipeline depth for K/V blocks (raise to 3 if a trace shows
    exposed K/V DMA after enlarging tq).
    """
    B, S, D = Q.shape
    assert K.shape == (B, S, D) and V.shape == (B, S, D)

    out_dtype = Q.dtype
    if compute_dtype is not None:
        Q = Q.astype(compute_dtype)
        K = K.astype(compute_dtype)
        V = V.astype(compute_dtype)
    in_dtype = Q.dtype

    tq = _pick_tile(S, tq)
    tk = _pick_tile(S, tk)
    # v7x has two TensorCores: make sure the "parallel" axes give >= 2 slices.
    while B * (S // tq) < 2 and tq > 128 and S % (tq // 2) == 0:
        tq //= 2
    n_q, n_k = S // tq, S // tk
    scale = 1.0 / float(D) ** 0.5
    # Exact per-row divide for f32 outputs (it is one (tq,1) op per q-tile);
    # EUP approximate reciprocal only when the output is 16-bit.
    approx_recip = jnp.dtype(out_dtype).itemsize < 4

    scratch_shapes = [
        pltpu.VMEM((tq, 1), jnp.float32),   # running row max  m
        pltpu.VMEM((tq, 1), jnp.float32),   # running row sum  l
        pltpu.VMEM((tq, D), jnp.float32),   # f32 output accumulator
        pltpu.VMEM((tq, D), in_dtype),      # scaled Q (hoisted out of k-loop)
    ]

    def _kv_spec(index_map):
        if kv_buffers != 2:
            return pl.BlockSpec((pl.Squeezed(), tk, D), index_map,
                                pipeline_mode=pl.Buffered(kv_buffers))
        return pl.BlockSpec((pl.Squeezed(), tk, D), index_map)

    if valid_len is None:
        # Specialized no-mask kernel: no iota/compare/select at all.
        kernel = functools.partial(_kernel_nomask, scale=scale, tk=tk,
                                   approx_recip=approx_recip)
        grid_spec = pltpu.PrefetchScalarGridSpec(
            num_scalar_prefetch=0,
            grid=(B, n_q, n_k),
            in_specs=[
                pl.BlockSpec((pl.Squeezed(), tq, D), lambda b, qi, ki: (b, qi, 0)),
                _kv_spec(lambda b, qi, ki: (b, ki, 0)),
                _kv_spec(lambda b, qi, ki: (b, ki, 0)),
            ],
            out_specs=pl.BlockSpec((pl.Squeezed(), tq, D),
                                   lambda b, qi, ki: (b, qi, 0)),
            scratch_shapes=scratch_shapes)
        args = (Q, K, V)
    else:
        vl = jnp.asarray(valid_len, dtype=jnp.int32).reshape(B)

        def kv_index(b, qi, ki, vl_ref):
            # Clamp the block index for fully-masked k-tiles: the index then
            # repeats across steps, so Pallas issues no new HBM->VMEM DMA for
            # tiles the kernel skips anyway.
            last_live = jnp.maximum(vl_ref[b] // tk, 0)
            return (b, jnp.minimum(ki, last_live), 0)

        kernel = functools.partial(_kernel_masked, scale=scale, tk=tk,
                                   approx_recip=approx_recip)
        grid_spec = pltpu.PrefetchScalarGridSpec(
            num_scalar_prefetch=1,               # valid_len lives in SMEM
            grid=(B, n_q, n_k),
            in_specs=[
                pl.BlockSpec((pl.Squeezed(), tq, D),
                             lambda b, qi, ki, vl_ref: (b, qi, 0)),
                _kv_spec(kv_index),
                _kv_spec(kv_index),
            ],
            out_specs=pl.BlockSpec((pl.Squeezed(), tq, D),
                                   lambda b, qi, ki, vl_ref: (b, qi, 0)),
            scratch_shapes=scratch_shapes)
        args = (vl, Q, K, V)

    vmem_limit = _vmem_limit_bytes(tq, tk, D, jnp.dtype(in_dtype).itemsize,
                                   jnp.dtype(out_dtype).itemsize, kv_buffers)

    return pl.pallas_call(
        kernel,
        out_shape=jax.ShapeDtypeStruct((B, S, D), out_dtype),
        grid_spec=grid_spec,
        compiler_params=pltpu.CompilerParams(
            dimension_semantics=("parallel", "parallel", "arbitrary"),
            vmem_limit_bytes=vmem_limit),
    )(*args)


def _dot_att_ref(K, V, Q, valid_len=None):
    """Pure-JAX reference mirroring the PyTorch forward (eval mode)."""
    B, S, D = Q.shape
    score = jnp.einsum("bqd,bkd->bqk", Q.astype(jnp.float32),
                       K.astype(jnp.float32)) / float(D) ** 0.5
    if valid_len is not None:
        vl = jnp.asarray(valid_len, dtype=jnp.int32).reshape(B, 1, 1)
        idx = jnp.arange(S, dtype=jnp.int32).reshape(1, 1, S)
        score = jnp.where(idx > vl, -1e6, score)
    att = jax.nn.softmax(score, axis=-1)
    return jnp.einsum("bqk,bkd->bqd", att, V.astype(jnp.float32)).astype(Q.dtype)


if __name__ == "__main__":
    # Shapes from the PyTorch spec: batch=2, seq_lenth=2, dim=4.
    batch, seq_len, dim = 2, 2, 4
    key = jax.random.PRNGKey(0)
    kK, kQ, kV = jax.random.split(key, 3)
    K = jax.random.uniform(kK, (batch, seq_len, dim), dtype=jnp.float32)
    Q = jax.random.uniform(kQ, (batch, seq_len, dim), dtype=jnp.float32)
    V = jax.random.uniform(kV, (batch, seq_len, dim), dtype=jnp.float32)

    tol = dict(atol=2e-3, rtol=2e-3)

    # Unmasked path (specialized no-mask kernel).
    out = jax.block_until_ready(dot_att(K, V, Q))
    assert out.shape == (batch, seq_len, dim) and out.dtype == Q.dtype
    assert jnp.allclose(out, _dot_att_ref(K, V, Q), **tol)

    # Masked path (per-batch valid_len, strict '>' masking as in PyTorch).
    vl = jnp.array([0, 1], dtype=jnp.int32)
    out_m = jax.block_until_ready(dot_att(K, V, Q, valid_len=vl))
    assert jnp.allclose(out_m, _dot_att_ref(K, V, Q, valid_len=vl), **tol)

    # Multi-tile flash path (test-only small tiles so n_q = n_k = 2),
    # exercising masked-tile skip + clamped K/V DMA.
    B2, S2, D2 = 2, 256, 128
    k2 = jax.random.split(jax.random.PRNGKey(1), 3)
    K2 = jax.random.uniform(k2[0], (B2, S2, D2), dtype=jnp.float32)
    Q2 = jax.random.uniform(k2[1], (B2, S2, D2), dtype=jnp.float32)
    V2 = jax.random.uniform(k2[2], (B2, S2, D2), dtype=jnp.float32)
    vl2 = jnp.array([200, 37], dtype=jnp.int32)

    out2 = jax.block_until_ready(dot_att(K2, V2, Q2, tq=128, tk=128))
    assert jnp.allclose(out2, _dot_att_ref(K2, V2, Q2), **tol)
    out2m = jax.block_until_ready(
        dot_att(K2, V2, Q2, valid_len=vl2, tq=128, tk=128))
    assert jnp.allclose(out2m, _dot_att_ref(K2, V2, Q2, valid_len=vl2), **tol)

    # Default (large) tile preferences — here capped by S, one tile per axis.
    out2d = jax.block_until_ready(dot_att(K2, V2, Q2, valid_len=vl2))
    assert jnp.allclose(out2d, _dot_att_ref(K2, V2, Q2, valid_len=vl2), **tol)

    # bf16 fast path: bf16 operands on the MXU, f32 accumulation, f32 output.
    out_bf = jax.block_until_ready(
        dot_att(K2, V2, Q2, valid_len=vl2, compute_dtype=jnp.bfloat16))
    assert out_bf.dtype == jnp.float32
    assert jnp.allclose(out_bf, _dot_att_ref(K2, V2, Q2, valid_len=vl2),
                        atol=2e-2, rtol=2e-2)

    print("KERNEL_OK")
</pallas_src>

<mosaic_0001>
module attributes {stable_mosaic.version = 11 : i64} {
  func.func @_kernel_nomask(%arg0: i32, %arg1: i32, %arg2: i32, %arg3: memref<1x2x4xf32, #tpu.memory_space<vmem>>, %arg4: memref<1x2x4xf32, #tpu.memory_space<vmem>>, %arg5: memref<1x2x4xf32, #tpu.memory_space<vmem>>, %arg6: memref<1x2x4xf32, #tpu.memory_space<vmem>>, %arg7: memref<2x1xf32, #tpu.memory_space<vmem>>, %arg8: memref<2x1xf32, #tpu.memory_space<vmem>>, %arg9: memref<2x4xf32, #tpu.memory_space<vmem>>, %arg10: memref<2x4xf32, #tpu.memory_space<vmem>>) attributes {dimension_semantics = [#tpu.dimension_semantics<parallel>, #tpu.dimension_semantics<parallel>, #tpu.dimension_semantics<arbitrary>], iteration_bounds = array<i64: 2, 1, 1>, scalar_prefetch = 0 : i64, scratch_operands = 4 : i64, tpu.core_type = #tpu.core_type<tc>, window_params = [{transform_indices = @transform_0, window_bounds = array<i64: 1, 2, 4>}, {transform_indices = @transform_1, window_bounds = array<i64: 1, 2, 4>}, {transform_indices = @transform_2, window_bounds = array<i64: 1, 2, 4>}, {transform_indices = @transform_3, window_bounds = array<i64: 1, 2, 4>}]} {
    %c0_i32 = arith.constant 0 : i32
    %0 = arith.cmpi eq, %arg2, %c0_i32 : i32
    %1 = arith.extui %0 : i1 to i32
    %c0_i32_0 = arith.constant 0 : i32
    %2 = arith.cmpi ne, %1, %c0_i32_0 : i32
    scf.if %2 {
      %cst_25 = arith.constant 0xFF800000 : f32
      %34 = vector.broadcast %cst_25 : f32 to vector<2x1xf32>
      %c0_26 = arith.constant 0 : index
      %c0_27 = arith.constant 0 : index
      %35 = vector.load %arg7[%c0_26, %c0_27] : memref<2x1xf32, #tpu.memory_space<vmem>>, vector<2x1xf32>
      tpu.vector_store %arg7[%c0_26, %c0_27], %34 {strides = array<i32>} : memref<2x1xf32, #tpu.memory_space<vmem>>, vector<2x1xf32>,
      %cst_28 = arith.constant 0.000000e+00 : f32
      %36 = vector.broadcast %cst_28 : f32 to vector<2x1xf32>
      %c0_29 = arith.constant 0 : index
      %c0_30 = arith.constant 0 : index
      %37 = vector.load %arg8[%c0_29, %c0_30] : memref<2x1xf32, #tpu.memory_space<vmem>>, vector<2x1xf32>
      tpu.vector_store %arg8[%c0_29, %c0_30], %36 {strides = array<i32>} : memref<2x1xf32, #tpu.memory_space<vmem>>, vector<2x1xf32>,
      %cst_31 = arith.constant 0.000000e+00 : f32
      %38 = vector.broadcast %cst_31 : f32 to vector<2x4xf32>
      %c0_32 = arith.constant 0 : index
      %c0_33 = arith.constant 0 : index
      %39 = vector.load %arg9[%c0_32, %c0_33] : memref<2x4xf32, #tpu.memory_space<vmem>>, vector<2x4xf32>
      tpu.vector_store %arg9[%c0_32, %c0_33], %38 {strides = array<i32>} : memref<2x4xf32, #tpu.memory_space<vmem>>, vector<2x4xf32>,
      %c0_34 = arith.constant 0 : index
      %c0_35 = arith.constant 0 : index
      %c0_36 = arith.constant 0 : index
      %40 = vector.load %arg3[%c0_34, %c0_35, %c0_36] : memref<1x2x4xf32, #tpu.memory_space<vmem>>, vector<1x2x4xf32>
      %41 = vector.shape_cast %40 : vector<1x2x4xf32> to vector<2x4xf32>
      %cst_37 = arith.constant 5.000000e-01 : f32
      %42 = vector.broadcast %cst_37 : f32 to vector<2x4xf32>
      %43 = arith.mulf %41, %42 : vector<2x4xf32>
      %c0_38 = arith.constant 0 : index
      %c0_39 = arith.constant 0 : index
      %44 = vector.load %arg10[%c0_38, %c0_39] : memref<2x4xf32, #tpu.memory_space<vmem>>, vector<2x4xf32>
      tpu.vector_store %arg10[%c0_38, %c0_39], %43 {strides = array<i32>} : memref<2x4xf32, #tpu.memory_space<vmem>>, vector<2x4xf32>,
    } else {
    }
    %c0 = arith.constant 0 : index
    %c0_1 = arith.constant 0 : index
    %3 = vector.load %arg10[%c0, %c0_1] : memref<2x4xf32, #tpu.memory_space<vmem>>, vector<2x4xf32>
    %c0_2 = arith.constant 0 : index
    %c0_3 = arith.constant 0 : index
    %c0_4 = arith.constant 0 : index
    %4 = vector.load %arg4[%c0_2, %c0_3, %c0_4] : memref<1x2x4xf32, #tpu.memory_space<vmem>>, vector<1x2x4xf32>
    %5 = vector.shape_cast %4 : vector<1x2x4xf32> to vector<2x4xf32>
    %cst = arith.constant dense<0.000000e+00> : vector<2x2xf32>
    %6 = tpu.matmul %3, %5, %cst {dimension_numbers = #tpu.dot_dimension_numbers<[1], [1], [0], [0], [0, 0, 1, 0], [], []>} : vector<2x4xf32>, vector<2x4xf32>, vector<2x2xf32> -> vector<2x2xf32>
    %c0_5 = arith.constant 0 : index
    %c0_6 = arith.constant 0 : index
    %7 = vector.load %arg7[%c0_5, %c0_6] : memref<2x1xf32, #tpu.memory_space<vmem>>, vector<2x1xf32>
    %cst_7 = arith.constant dense<0xFF800000> : vector<2xf32>
    %8 = vector.multi_reduction <maximumf>, %6, %cst_7 [1] : vector<2x2xf32> to vector<2xf32>
    %9 = vector.shape_cast %8 : vector<2xf32> to vector<2x1xf32>
    %10 = arith.maximumf %7, %9 : vector<2x1xf32>
    %11 = arith.subf %7, %10 : vector<2x1xf32>
    %12 = math.exp %11 : vector<2x1xf32>
    %13 = vector.broadcast %10 : vector<2x1xf32> to vector<2x2xf32>
    %14 = arith.subf %6, %13 : vector<2x2xf32>
    %15 = math.exp %14 : vector<2x2xf32>
    %c0_8 = arith.constant 0 : index
    %c0_9 = arith.constant 0 : index
    %16 = vector.load %arg8[%c0_8, %c0_9] : memref<2x1xf32, #tpu.memory_space<vmem>>, vector<2x1xf32>
    %17 = arith.mulf %12, %16 : vector<2x1xf32>
    %cst_10 = arith.constant dense<0.000000e+00> : vector<2xf32>
    %18 = vector.multi_reduction <add>, %15, %cst_10 [1] : vector<2x2xf32> to vector<2xf32>
    %19 = vector.shape_cast %18 : vector<2xf32> to vector<2x1xf32>
    %20 = arith.addf %17, %19 : vector<2x1xf32>
    %c0_11 = arith.constant 0 : index
    %c0_12 = arith.constant 0 : index
    %21 = vector.load %arg8[%c0_11, %c0_12] : memref<2x1xf32, #tpu.memory_space<vmem>>, vector<2x1xf32>
    tpu.vector_store %arg8[%c0_11, %c0_12], %20 {strides = array<i32>} : memref<2x1xf32, #tpu.memory_space<vmem>>, vector<2x1xf32>,
    %c0_13 = arith.constant 0 : index
    %c0_14 = arith.constant 0 : index
    %22 = vector.load %arg9[%c0_13, %c0_14] : memref<2x4xf32, #tpu.memory_space<vmem>>, vector<2x4xf32>
    %23 = vector.broadcast %12 : vector<2x1xf32> to vector<2x4xf32>
    %24 = arith.mulf %23, %22 : vector<2x4xf32>
    %c0_15 = arith.constant 0 : index
    %c0_16 = arith.constant 0 : index
    %c0_17 = arith.constant 0 : index
    %25 = vector.load %arg5[%c0_15, %c0_16, %c0_17] : memref<1x2x4xf32, #tpu.memory_space<vmem>>, vector<1x2x4xf32>
    %26 = vector.shape_cast %25 : vector<1x2x4xf32> to vector<2x4xf32>
    %cst_18 = arith.constant dense<0.000000e+00> : vector<2x4xf32>
    %27 = tpu.matmul %15, %26, %cst_18 {dimension_numbers = #tpu.dot_dimension_numbers<[1], [0], [0], [1], [0, 0, 1, 1], [], []>} : vector<2x2xf32>, vector<2x4xf32>, vector<2x4xf32> -> vector<2x4xf32>
    %28 = arith.addf %24, %27 : vector<2x4xf32>
    %c0_19 = arith.constant 0 : index
    %c0_20 = arith.constant 0 : index
    %29 = vector.load %arg9[%c0_19, %c0_20] : memref<2x4xf32, #tpu.memory_space<vmem>>, vector<2x4xf32>
    tpu.vector_store %arg9[%c0_19, %c0_20], %28 {strides = array<i32>} : memref<2x4xf32, #tpu.memory_space<vmem>>, vector<2x4xf32>,
    %c0_21 = arith.constant 0 : index
    %c0_22 = arith.constant 0 : index
    %30 = vector.load %arg7[%c0_21, %c0_22] : memref<2x1xf32, #tpu.memory_space<vmem>>, vector<2x1xf32>
    tpu.vector_store %arg7[%c0_21, %c0_22], %10 {strides = array<i32>} : memref<2x1xf32, #tpu.memory_space<vmem>>, vector<2x1xf32>,
    %c0_i32_23 = arith.constant 0 : i32
    %31 = arith.cmpi eq, %arg2, %c0_i32_23 : i32
    %32 = arith.extui %31 : i1 to i32
    %c0_i32_24 = arith.constant 0 : i32
    %33 = arith.cmpi ne, %32, %c0_i32_24 : i32
    scf.if %33 {
      %c0_25 = arith.constant 0 : index
      %c0_26 = arith.constant 0 : index
      %34 = vector.load %arg9[%c0_25, %c0_26] : memref<2x4xf32, #tpu.memory_space<vmem>>, vector<2x4xf32>
      %c0_27 = arith.constant 0 : index
      %c0_28 = arith.constant 0 : index
      %35 = vector.load %arg8[%c0_27, %c0_28] : memref<2x1xf32, #tpu.memory_space<vmem>>, vector<2x1xf32>
      %36 = tpu.reciprocal %35 : vector<2x1xf32> -> vector<2x1xf32>
      %37 = vector.broadcast %36 : vector<2x1xf32> to vector<2x4xf32>
      %38 = arith.mulf %34, %37 : vector<2x4xf32>
      %c0_29 = arith.constant 0 : index
      %c0_30 = arith.constant 0 : index
      %c0_31 = arith.constant 0 : index
      %39 = vector.load %arg6[%c0_29, %c0_30, %c0_31] : memref<1x2x4xf32, #tpu.memory_space<vmem>>, vector<1x2x4xf32>
      %40 = vector.shape_cast %39 : vector<1x2x4xf32> to vector<2x4xf32>
      %41 = vector.shape_cast %38 : vector<2x4xf32> to vector<1x2x4xf32>
      tpu.vector_store %arg6[%c0_29, %c0_30, %c0_31], %41 {strides = array<i32>} : memref<1x2x4xf32, #tpu.memory_space<vmem>>, vector<1x2x4xf32>,
    } else {
    }
    return
  }
  func.func @transform_0(%arg0: i32, %arg1: i32, %arg2: i32) -> (i32, i32, i32) {
    %c0_i32 = arith.constant 0 : i32
    %c0_i32_0 = arith.constant 0 : i32
    return %arg0, %arg1, %c0_i32 : i32, i32, i32
  }
  func.func @transform_1(%arg0: i32, %arg1: i32, %arg2: i32) -> (i32, i32, i32) {
    %c0_i32 = arith.constant 0 : i32
    %c0_i32_0 = arith.constant 0 : i32
    return %arg0, %arg2, %c0_i32 : i32, i32, i32
  }
  func.func @transform_2(%arg0: i32, %arg1: i32, %arg2: i32) -> (i32, i32, i32) {
    %c0_i32 = arith.constant 0 : i32
    %c0_i32_0 = arith.constant 0 : i32
    return %arg0, %arg2, %c0_i32 : i32, i32, i32
  }
  func.func @transform_3(%arg0: i32, %arg1: i32, %arg2: i32) -> (i32, i32, i32) {
    %c0_i32 = arith.constant 0 : i32
    %c0_i32_0 = arith.constant 0 : i32
    return %arg0, %arg1, %c0_i32 : i32, i32, i32
  }
}

</mosaic_0001>

<llo_original>
// kernel: tpu_custom_call.1
$region0: #{tpu_custom_call.1}
  #allocation0 [shape = 'u32[]', space=smem, size = 0x4, offset = 0x4, fixed_abs, tag = 'smem constant byte address 0x4 - core index']
  #allocation1 [shape = 'u32[144,128]{1,0:T(1,128)}', space=vmem, size = 0x12000, scoped, tag = 'internal scratch']
  #allocation2 [shape = 'f32[2,1]{1,0:T(2,128)}', space=vmem, size = 0x400, scoped, tag = 'scratch operand']
  #allocation3 [shape = 'f32[2,1]{1,0:T(2,128)}', space=vmem, size = 0x400, scoped, tag = 'scratch operand']
  #allocation4 [shape = 'f32[2,4]{1,0:T(2,128)}', space=vmem, size = 0x400, scoped, tag = 'scratch operand']
  #allocation5 [shape = 'f32[2,4]{1,0:T(2,128)}', space=vmem, size = 0x400, scoped, tag = 'scratch operand']
  %s0 = inlined_call_operand.hbm [shape: f32[2,2,4], index: 0, kind: input, shape index: {}]
  %s1 = inlined_call_operand.hbm [shape: f32[2,2,4], index: 1, kind: input, shape index: {}]
  %s2 = inlined_call_operand.vmem [shape: f32[2,2,4], index: 2, kind: input, shape index: {}]
  %s3 = inlined_call_operand.hbm [shape: f32[2,2,4], index: 3, kind: output, shape index: {}]
  %s4 = sld [smem:[#allocation0]]
  $region61: #{tpu_custom_call.1} parent=0
    _
  %s6 = ssub.s32 1, %s4
  %s7 = scalar_select 0, %s6, %s4
  $region1: #{tpu_custom_call.1} parent=0
    #allocation6 [shape = 'u8[2048]{0}', space=vmem, size = 0x800, scoped, tag = 'input window, operand 0']
    #allocation7 [shape = 's32[2]{0}', space=sflag, size = 0x8, scoped, tag = 'scoped memory for tpu_custom_call.1']
    #allocation8 [shape = 's32[2]{0}', space=sflag, size = 0x8, scoped, tag = 'scoped memory for tpu_custom_call.1']
    #allocation9 [shape = 'u8[2048]{0}', space=vmem, size = 0x800, scoped, tag = 'input window, operand 1']
    #allocation10 [shape = 's32[2]{0}', space=sflag, size = 0x8, scoped, tag = 'scoped memory for tpu_custom_call.1']
    #allocation11 [shape = 'u8[2048]{0}', space=vmem, size = 0x800, scoped, tag = 'output window, operand 0']
    %8 = vsyncpa [#allocation7], 0
    %s9 = scalar_lea.sflag [#allocation7], 1
    %10 = vsyncpa %s9, 0
    %11 = vsyncpa [#allocation10], 0
    %s12 = scalar_lea.sflag [#allocation10], 1
    %13 = vsyncpa %s12, 0
    %14 = vsyncpa [#allocation8], 0
    %s15 = scalar_lea.sflag [#allocation8], 1
    %16 = vsyncpa %s15, 0
    loop: start=0, step=1, limit=4
    $region2: #{tpu_custom_call.1} parent=1 // loop_pre_header
      _
    $region3: #{tpu_custom_call.1} parent=1 // loop_header
      %s18 = sphi 0, %s22
      %p19 = scmp.ge.s32.totalorder %s18, 4
      %s25 = sphi 0, %s44
      %s26 = sphi 0, %s40
      %s27 = sphi 0, %s36
      %s28 = sphi 0, %s25
      %s29 = sphi 0, %s26
      %s30 = sphi 0, %s27
      %s31 = sphi 0, %s28
      %s32 = sphi 0, %s29
      %s33 = sphi 0, %s30
      %s49 = sphi 0, %s51
      %s52 = sphi 0, %s49
      %s53 = sphi 0, %s52
      %s69 = sphi 0, %s53
      %s77 = sphi 0, %s79
      %s80 = sphi 0, %s77
      %s81 = sphi 0, %s80
      %s97 = sphi 0, %s81
      %s105 = sphi 0, %s107
      %s108 = sphi 0, %s105
      %s109 = sphi 0, %s108
      %s125 = sphi 0, %s109
      %s133 = sphi 0, %s135
      %s136 = sphi 0, %s133
      %s137 = sphi 0, %s136
      %s153 = sphi 0, %s137
    $region4: #{tpu_custom_call.1} parent=1 // loop_header_branch
      %21 = sbr.rel (%p19) target = $region8
    $region5: #{tpu_custom_call.1} parent=1 // loop_body
      %s23 = ssub.s32 %s18, 1
      %s24 = ssub.s32 %s18, 2
      %s34 = sadd.s32 1, %s27
      %p35 = scmp.ge.s32.totalorder %s34, 1
      %s36 = scalar_select %p35, 0, %s34
      %s37 = sadd.s32 1, %s26
      %s38 = scalar_select %p35, %s37, %s26
      %p39 = scmp.ge.s32.totalorder %s38, 1
      %s40 = scalar_select %p39, 0, %s38
      %s41 = sadd.s32 1, %s25
      %s42 = scalar_select %p39, %s41, %s25
      %p43 = scmp.ge.s32.totalorder %s42, 2
      %s44 = scalar_select %p43, 0, %s42
      %s45 = ssub.s32 %s25, %s44
      %s46 = ssub.s32 %s26, %s40
      %s47 = sor.u32 %s45, %s46
      %p48 = scmp.eq.s32.totalorder %s47, 0
      %s50 = sadd.s32 %s49, 1
      %s51 = scalar_select %p48, %s49, %s50
      %p54 = pneg %p48
      %p55 = scmp.eq.s32.totalorder %s18, 1
      %p56 = por %p54, %p55
      %p57 = scmp.ne.s32.totalorder %s49, %s52
      %p58 = scmp.eq.s32.totalorder %s18, 0
      %p59 = por %p57, %p58
      %p60 = scmp.ne.s32.totalorder %s49, %s52
      %p61 = scmp.eq.s32.totalorder %s23, 1
      %p62 = por %p60, %p61
      %p63 = scmp.ne.s32.totalorder %s52, %s53
      %p64 = scmp.eq.s32.totalorder %s23, 0
      %p65 = por %p63, %p64
      %p66 = scmp.ne.s32.totalorder %s52, %s53
      %p67 = scmp.eq.s32.totalorder %s24, 1
      %p68 = por %p66, %p67
      %p70 = scmp.ne.s32.totalorder %s53, %s69
      %p71 = scmp.eq.s32.totalorder %s24, 0
      %p72 = por %p70, %p71
      %s73 = ssub.s32 %s25, %s44
      %s74 = ssub.s32 %s27, %s36
      %s75 = sor.u32 %s73, %s74
      %p76 = scmp.eq.s32.totalorder %s75, 0
      %s78 = sadd.s32 %s77, 1
      %s79 = scalar_select %p76, %s77, %s78
      %p82 = pneg %p76
      %p83 = scmp.eq.s32.totalorder %s18, 1
      %p84 = por %p82, %p83
      %p85 = scmp.ne.s32.totalorder %s77, %s80
      %p86 = scmp.eq.s32.totalorder %s18, 0
      %p87 = por %p85, %p86
      %p88 = scmp.ne.s32.totalorder %s77, %s80
      %p89 = scmp.eq.s32.totalorder %s23, 1
      %p90 = por %p88, %p89
      %p91 = scmp.ne.s32.totalorder %s80, %s81
      %p92 = scmp.eq.s32.totalorder %s23, 0
      %p93 = por %p91, %p92
      %p94 = scmp.ne.s32.totalorder %s80, %s81
      %p95 = scmp.eq.s32.totalorder %s24, 1
      %p96 = por %p94, %p95
      %p98 = scmp.ne.s32.totalorder %s81, %s97
      %p99 = scmp.eq.s32.totalorder %s24, 0
      %p100 = por %p98, %p99
      %s101 = ssub.s32 %s25, %s44
      %s102 = ssub.s32 %s27, %s36
      %s103 = sor.u32 %s101, %s102
      %p104 = scmp.eq.s32.totalorder %s103, 0
      %s106 = sadd.s32 %s105, 1
      %s107 = scalar_select %p104, %s105, %s106
      %p110 = pneg %p104
      %p111 = scmp.eq.s32.totalorder %s18, 1
      %p112 = por %p110, %p111
      %p113 = scmp.ne.s32.totalorder %s105, %s108
      %p114 = scmp.eq.s32.totalorder %s18, 0
      %p115 = por %p113, %p114
      %p116 = scmp.ne.s32.totalorder %s105, %s108
      %p117 = scmp.eq.s32.totalorder %s23, 1
      %p118 = por %p116, %p117
      %p119 = scmp.ne.s32.totalorder %s108, %s109
      %p120 = scmp.eq.s32.totalorder %s23, 0
      %p121 = por %p119, %p120
      %p122 = scmp.ne.s32.totalorder %s108, %s109
      %p123 = scmp.eq.s32.totalorder %s24, 1
      %p124 = por %p122, %p123
      %p126 = scmp.ne.s32.totalorder %s109, %s125
      %p127 = scmp.eq.s32.totalorder %s24, 0
      %p128 = por %p126, %p127
      %s129 = ssub.s32 %s25, %s44
      %s130 = ssub.s32 %s26, %s40
      %s131 = sor.u32 %s129, %s130
      %p132 = scmp.eq.s32.totalorder %s131, 0
      %s134 = sadd.s32 %s133, 1
      %s135 = scalar_select %p132, %s133, %s134
      %p138 = pneg %p132
      %p139 = scmp.eq.s32.totalorder %s18, 1
      %p140 = por %p138, %p139
      %p141 = scmp.ne.s32.totalorder %s133, %s136
      %p142 = scmp.eq.s32.totalorder %s18, 0
      %p143 = por %p141, %p142
      %p144 = scmp.ne.s32.totalorder %s133, %s136
      %p145 = scmp.eq.s32.totalorder %s23, 1
      %p146 = por %p144, %p145
      %p147 = scmp.ne.s32.totalorder %s136, %s137
      %p148 = scmp.eq.s32.totalorder %s23, 0
      %p149 = por %p147, %p148
      %p150 = scmp.ne.s32.totalorder %s136, %s137
      %p151 = scmp.eq.s32.totalorder %s24, 1
      %p152 = por %p150, %p151
      %p154 = scmp.ne.s32.totalorder %s137, %s153
      %p155 = scmp.eq.s32.totalorder %s24, 0
      %p156 = por %p154, %p155
      %p157 = scmp.le.s32.totalorder 1, %s18
      %p158 = scmp.lt.s32.totalorder %s18, 3
      %p159 = pnand %p157, %p158
      %p160 = pneg %p159
      // Predicated region
      $region9: #{tpu_custom_call.1} parent=5 // pred_check
        _
      $region10: #{tpu_custom_call.1} parent=5 // pred_check_branch
        %162 = sbr.rel (%p159) target = $region12
      $region11: #{tpu_custom_call.1} parent=5 // pred_region
        %s163 = ssub.s32 %s18, 1
      $region12: #{tpu_custom_call.1} parent=5 // pred_fallthru
        _
      %p164 = scmp.lt.s32.totalorder %s18, 2
      // Predicated region
      $region13: #{tpu_custom_call.1} parent=5 // pred_check
        %p165 = pneg %p164
      $region14: #{tpu_custom_call.1} parent=5 // pred_check_branch
        %167 = sbr.rel (%p165) target = $region16
      $region15: #{tpu_custom_call.1} parent=5 // pred_region
        // Predicated region
        $region17: #{tpu_custom_call.1} parent=15 // pred_check
          %p168 = pneg %p59
        $region18: #{tpu_custom_call.1} parent=15 // pred_check_branch
          %170 = sbr.rel (%p168) target = $region20
        $region19: #{tpu_custom_call.1} parent=15 // pred_region
          %s171 = sand.u32 %s49, 1
          %s172 = scalar_lea.sflag [#allocation7], %s171
          %s173 = sand.u32 %s49, 1
          %s174 = smul.addr %s173, 2
          %s175 = scalar_lea.vmem [#allocation6], %s174
          %s177 = ssub.s32 32, 32
          %178 = vsyncadd %s172, %s177
          %s179 = sadd.s32 %s26, %s25
          %s180 = smul.addr %s179, 32
          %s181 = scalar_lea.hbm %s0, %s180
          %s183 = sshll.u32 %s175, 4
          %s184 = int_to_ptr.vmem [resolvable:$true] %s183
          %186 = dma.hbm_to_vmem [thread:$0]  %s181, 32, %s184, %s172
        $region20: #{tpu_custom_call.1} parent=15 // pred_fallthru
          _
        // Predicated region
        $region21: #{tpu_custom_call.1} parent=15 // pred_check
          %p187 = pneg %p87
        $region22: #{tpu_custom_call.1} parent=15 // pred_check_branch
          %189 = sbr.rel (%p187) target = $region24
        $region23: #{tpu_custom_call.1} parent=15 // pred_region
          %s190 = sand.u32 %s77, 1
          %s191 = scalar_lea.sflag [#allocation10], %s190
          %s192 = sand.u32 %s77, 1
          %s193 = smul.addr %s192, 2
          %s194 = scalar_lea.vmem [#allocation9], %s193
          %s196 = ssub.s32 32, 32
          %197 = vsyncadd %s191, %s196
          %s198 = sadd.s32 %s27, %s25
          %s199 = smul.addr %s198, 32
          %s200 = scalar_lea.hbm %s1, %s199
          %s202 = sshll.u32 %s194, 4
          %s203 = int_to_ptr.vmem [resolvable:$true] %s202
          %205 = dma.hbm_to_vmem [thread:$0]  %s200, 32, %s203, %s191
        $region24: #{tpu_custom_call.1} parent=15 // pred_fallthru
          _
        // Predicated region
        $region25: #{tpu_custom_call.1} parent=15 // pred_check
          %p206 = pneg %p115
        $region26: #{tpu_custom_call.1} parent=15 // pred_check_branch
          %208 = sbr.rel (%p206) target = $region28
        $region27: #{tpu_custom_call.1} parent=15 // pred_region
          %p209 = scmp.lt.s32.totalorder %s25, 1
          %s210 = scalar_select %p209, %s25, 1
          %p211 = scmp.lt.s32.totalorder %s27, 0
          %s212 = scalar_select %p211, %s27, 0
          %s213 = sadd.s32 %s212, %s210
          %s214 = smul.addr %s213, 2
          %s215 = scalar_lea.vmem %s2, %s214
        $region28: #{tpu_custom_call.1} parent=15 // pred_fallthru
          _
      $region16: #{tpu_custom_call.1} parent=5 // pred_fallthru
        _
      %p216 = scmp.le.s32.totalorder 1, %s18
      %p217 = scmp.lt.s32.totalorder %s18, 3
      %p218 = pnand %p216, %p217
      %p219 = pneg %p218
      // Predicated region
      $region29: #{tpu_custom_call.1} parent=5 // pred_check
        _
      $region30: #{tpu_custom_call.1} parent=5 // pred_check_branch
        %221 = sbr.rel (%p218) target = $region32
      $region31: #{tpu_custom_call.1} parent=5 // pred_region
        %s222 = ssub.s32 %s18, 1
        %s223 = sand.u32 %s52, 1
        %s224 = scalar_lea.sflag [#allocation7], %s223
        %s225 = sand.u32 %s52, 1
        %s226 = smul.addr %s225, 2
        %s227 = scalar_lea.vmem [#allocation6], %s226
        // Predicated region
        $region33: #{tpu_custom_call.1} parent=31 // pred_check
          %p228 = pneg %p65
        $region34: #{tpu_custom_call.1} parent=31 // pred_check_branch
          %230 = sbr.rel (%p228) target = $region36
        $region35: #{tpu_custom_call.1} parent=31 // pred_region
          %231 = dma.done %s224, 32
        $region36: #{tpu_custom_call.1} parent=31 // pred_fallthru
          _
        %s232 = sand.u32 %s80, 1
        %s233 = scalar_lea.sflag [#allocation10], %s232
        %s234 = sand.u32 %s80, 1
        %s235 = smul.addr %s234, 2
        %s236 = scalar_lea.vmem [#allocation9], %s235
        // Predicated region
        $region37: #{tpu_custom_call.1} parent=31 // pred_check
          %p237 = pneg %p93
        $region38: #{tpu_custom_call.1} parent=31 // pred_check_branch
          %239 = sbr.rel (%p237) target = $region40
        $region39: #{tpu_custom_call.1} parent=31 // pred_region
          %240 = dma.done %s233, 32
        $region40: #{tpu_custom_call.1} parent=31 // pred_fallthru
          _
        %s241 = sand.u32 %s52, 1
        %s242 = scalar_lea.sflag [#allocation7], %s241
        %s243 = sand.u32 %s52, 1
        %s244 = smul.addr %s243, 2
        %s245 = scalar_lea.vmem [#allocation6], %s244
        %p246 = pneg %p65
        %p247 = pneg %p62
        %s248 = sand.u32 %s80, 1
        %s249 = scalar_lea.sflag [#allocation10], %s248
        %s250 = sand.u32 %s80, 1
        %s251 = smul.addr %s250, 2
        %s252 = scalar_lea.vmem [#allocation9], %s251
        %p253 = pneg %p93
        %p254 = pneg %p90
        %p255 = scmp.lt.s32.totalorder %s28, 1
        %s256 = scalar_select %p255, %s28, 1
        %p257 = scmp.lt.s32.totalorder %s30, 0
        %s258 = scalar_select %p257, %s30, 0
        %s259 = sadd.s32 %s258, %s256
        %s260 = smul.addr %s259, 2
        %s261 = scalar_lea.vmem %s2, %s260
        %p262 = pneg %p121
        %p263 = pneg %p118
        %p264 = pneg %p149
        %p265 = pneg %p146
        %s266 = sand.u32 %s136, 1
        %s267 = scalar_lea.sflag [#allocation8], %s266
        %s268 = sand.u32 %s136, 1
        %s269 = smul.addr %s268, 2
        %s270 = scalar_lea.vmem [#allocation11], %s269
        %p271 = scmp.lt.s32.totalorder %s28, 1
        %s272 = scalar_select %p271, %s28, 1
        %p273 = scmp.lt.s32.totalorder %s30, 0
        %s274 = scalar_select %p273, %s30, 0
        %s275 = sadd.s32 %s274, %s272
        %s276 = smul.addr %s275, 2
        %s277 = scalar_lea.vmem %s2, %s276
        %p278 = scmp.eq.s32.totalorder %s30, 0
        // Predicated region
        $region41: #{tpu_custom_call.1} parent=31 // pred_check
          %p279 = pneg %p278
        $region42: #{tpu_custom_call.1} parent=31 // pred_check_branch
          %281 = sbr.rel (%p279) target = $region44
        $region43: #{tpu_custom_call.1} parent=31 // pred_region
          %vm282 = vcmask 1024
          %283 = vst.msk [vmem:[#allocation2] sm:$0x3] %vm282, -inf
          %284 = vst.msk [vmem:[#allocation3] sm:$0x3] %vm282, 0.0
          %vm285 = vcmask 25600
          %286 = vst.msk [vmem:[#allocation4] sm:$0x3] %vm285, 0.0
          %v287 = vld [vmem:[%s227] sm:$0x3]
          %v288 = vmul.f32 %v287, 0.5
          %289 = vst.msk [vmem:[#allocation5] sm:$0x3] %vm285, %v288
        $region44: #{tpu_custom_call.1} parent=31 // pred_fallthru
          _
        %v290 = vld [vmem:[#allocation5] sm:$0x3]
        %v291 = vld [vmem:[%s236] sm:$0x3]
        %vm292 = vcmask 31744
        %v294 = vsel %vm292, %v290, 0
        %v297 = vsel %vm292, %v291, 0
        %299 = vmatprep.subr.mxu0 0.0
        %300 = vmatpush1.xpose.msra.mxu0 %v297
        %301 = vmatprep.subr.mxu0 0.0
        %302 = vmatpush1.xpose.msra.mxu0 0.0
        %303 = vmatprep.subr.mxu0 0.0
        %304 = vmatpush1.xpose.msra.mxu0 0.0
        %305 = vmatprep.subr.mxu0 0.0
        %306 = vmatpush1.xpose.msra.mxu0 0.0
        %307 = vmatprep.subr.mxu0 0.0
        %308 = vmatpush1.xpose.msra.mxu0 0.0
        %309 = vmatprep.subr.mxu0 0.0
        %310 = vmatpush1.xpose.msra.mxu0 0.0
        %311 = vmatprep.subr.mxu0 0.0
        %312 = vmatpush1.xpose.msra.mxu0 0.0
        %313 = vmatprep.subr.mxu0 0.0
        %314 = vmatpush1.xpose.msra.mxu0 0.0
        %315 = vmatprep.subr.mxu0 0.0
        %316 = vmatpush1.xpose.msra.mxu0 0.0
        %317 = vmatprep.subr.mxu0 0.0
        %318 = vmatpush1.xpose.msra.mxu0 0.0
        %319 = vmatprep.subr.mxu0 0.0
        %320 = vmatpush1.xpose.msra.mxu0 0.0
        %321 = vmatprep.subr.mxu0 0.0
        %322 = vmatpush1.xpose.msra.mxu0 0.0
        %323 = vmatprep.subr.mxu0 0.0
        %324 = vmatpush1.xpose.msra.mxu0 0.0
        %325 = vmatprep.subr.mxu0 0.0
        %326 = vmatpush1.xpose.msra.mxu0 0.0
        %327 = vmatprep.subr.mxu0 0.0
        %328 = vmatpush1.xpose.msra.mxu0 0.0
        %329 = vmatprep.subr.mxu0 0.0
        %330 = vmatpush1.xpose.msra.mxu0 0.0
        %331 = vmatprep.subr.mxu0 0.0
        %332 = vmatpush1.xpose.msra.mxu0 0.0
        %333 = vmatprep.subr.mxu0 0.0
        %334 = vmatpush1.xpose.msra.mxu0 0.0
        %335 = vmatprep.subr.mxu0 0.0
        %336 = vmatpush1.xpose.msra.mxu0 0.0
        %337 = vmatprep.subr.mxu0 0.0
        %338 = vmatpush1.xpose.msra.mxu0 0.0
        %339 = vmatprep.subr.mxu0 0.0
        %340 = vmatpush1.xpose.msra.mxu0 0.0
        %341 = vmatprep.subr.mxu0 0.0
        %342 = vmatpush1.xpose.msra.mxu0 0.0
        %343 = vmatprep.subr.mxu0 0.0
        %344 = vmatpush1.xpose.msra.mxu0 0.0
        %345 = vmatprep.subr.mxu0 0.0
        %346 = vmatpush1.xpose.msra.mxu0 0.0
        %347 = vmatprep.subr.mxu0 0.0
        %348 = vmatpush1.xpose.msra.mxu0 0.0
        %349 = vmatprep.subr.mxu0 0.0
        %350 = vmatpush1.xpose.msra.mxu0 0.0
        %351 = vmatprep.subr.mxu0 0.0
        %352 = vmatpush1.xpose.msra.mxu0 0.0
        %353 = vmatprep.subr.mxu0 0.0
        %354 = vmatpush1.xpose.msra.mxu0 0.0
        %355 = vmatprep.subr.mxu0 0.0
        %356 = vmatpush1.xpose.msra.mxu0 0.0
        %357 = vmatprep.subr.mxu0 0.0
        %358 = vmatpush1.xpose.msra.mxu0 0.0
        %359 = vmatprep.subr.mxu0 0.0
        %360 = vmatpush1.xpose.msra.mxu0 0.0
        %361 = vmatprep.subr.mxu0 0.0
        %362 = vmatpush1.xpose.msra.mxu0 0.0
        %363 = vmatprep.mubr.f32.mxu0 0.0
        %364 = vmatmul.mubr.f32.gmra.mrb[0].mxu0 %v294
        %v365 = vpop.f32.mrb[0].mxu0
        %v366 = vadd.f32 0.0, %v365
        %v367 = vpop.f32.mrb[0].mxu0
        %368 = vdwg.mxu0
        %v369 = vld [vmem:[#allocation2] sm:$0x3]
        %vm370 = vcmask 9216
        %v371 = vsel %vm370, %v366, -inf
        %372 = vmax.xlane.f32.xlu0 %v371
        %v373 = vpop.xlane.xlu0 %372
        %v374 = vmax.f32 %v369, %v373
        %v375 = vsub.f32 %v369, %v374
        %v376 = vmul.f32 %v375, 1.442695
        %v377 = vpow.pop %v376
        %379 = vset.pattern.permute.xlu0 0
        %380 = vperm.xlu0 %379, %v374
        %v381 = vpop.permute.xlu0 %380
        %v383 = vsub.f32 %v366, %v381
        %v384 = vmul.f32 %v383, 1.442695
        %v385 = vpow.pop %v384
        %v386 = vld [vmem:[#allocation3] sm:$0x3]
        %v387 = vmul.f32 %v377, %v386
        %v388 = vsel %vm370, %v385, 0.0
        %389 = vadd.xlane.f32.xlu0 %v388
        %v390 = vpop.xlane.xlu0 %389
        %v391 = vadd.f32 %v387, %v390
        %vm392 = vcmask 1024
        %393 = vst.msk [vmem:[#allocation3] sm:$0x3] %vm392, %v391
        %v394 = vld [vmem:[#allocation4] sm:$0x3]
        %396 = vset.pattern.permute.xlu0 0
        %397 = vperm.xlu0 %396, %v377
        %v398 = vpop.permute.xlu0 %397
        %v400 = vmul.f32 %v398, %v394
        %v401 = vld [vmem:[%s277] sm:$0x3]
        %vm402 = vcmask 15360
        %v404 = vsel %vm402, %v385, 0
        %vm406 = vcmask 1041408
        %v408 = vsel %vm406, %v401, 0
        %410 = vmatprep.subr.mxu0 0.0
        %411 = vmatpush1.msra.mxu0 %v408
        %412 = vmatprep.subr.mxu0 0.0
        %413 = vmatpush1.msra.mxu0 0.0
        %414 = vmatprep.subr.mxu0 0.0
        %415 = vmatpush1.msra.mxu0 0.0
        %416 = vmatprep.subr.mxu0 0.0
        %417 = vmatpush1.msra.mxu0 0.0
        %418 = vmatprep.subr.mxu0 0.0
        %419 = vmatpush1.msra.mxu0 0.0
        %420 = vmatprep.subr.mxu0 0.0
        %421 = vmatpush1.msra.mxu0 0.0
        %422 = vmatprep.subr.mxu0 0.0
        %423 = vmatpush1.msra.mxu0 0.0
        %424 = vmatprep.subr.mxu0 0.0
        %425 = vmatpush1.msra.mxu0 0.0
        %426 = vmatprep.subr.mxu0 0.0
        %427 = vmatpush1.msra.mxu0 0.0
        %428 = vmatprep.subr.mxu0 0.0
        %429 = vmatpush1.msra.mxu0 0.0
        %430 = vmatprep.subr.mxu0 0.0
        %431 = vmatpush1.msra.mxu0 0.0
        %432 = vmatprep.subr.mxu0 0.0
        %433 = vmatpush1.msra.mxu0 0.0
        %434 = vmatprep.subr.mxu0 0.0
        %435 = vmatpush1.msra.mxu0 0.0
        %436 = vmatprep.subr.mxu0 0.0
        %437 = vmatpush1.msra.mxu0 0.0
        %438 = vmatprep.subr.mxu0 0.0
        %439 = vmatpush1.msra.mxu0 0.0
        %440 = vmatprep.subr.mxu0 0.0
        %441 = vmatpush1.msra.mxu0 0.0
        %442 = vmatprep.subr.mxu0 0.0
        %443 = vmatpush1.msra.mxu0 0.0
        %444 = vmatprep.subr.mxu0 0.0
        %445 = vmatpush1.msra.mxu0 0.0
        %446 = vmatprep.subr.mxu0 0.0
        %447 = vmatpush1.msra.mxu0 0.0
        %448 = vmatprep.subr.mxu0 0.0
        %449 = vmatpush1.msra.mxu0 0.0
        %450 = vmatprep.subr.mxu0 0.0
        %451 = vmatpush1.msra.mxu0 0.0
        %452 = vmatprep.subr.mxu0 0.0
        %453 = vmatpush1.msra.mxu0 0.0
        %454 = vmatprep.subr.mxu0 0.0
        %455 = vmatpush1.msra.mxu0 0.0
        %456 = vmatprep.subr.mxu0 0.0
        %457 = vmatpush1.msra.mxu0 0.0
        %458 = vmatprep.subr.mxu0 0.0
        %459 = vmatpush1.msra.mxu0 0.0
        %460 = vmatprep.subr.mxu0 0.0
        %461 = vmatpush1.msra.mxu0 0.0
        %462 = vmatprep.subr.mxu0 0.0
        %463 = vmatpush1.msra.mxu0 0.0
        %464 = vmatprep.subr.mxu0 0.0
        %465 = vmatpush1.msra.mxu0 0.0
        %466 = vmatprep.subr.mxu0 0.0
        %467 = vmatpush1.msra.mxu0 0.0
        %468 = vmatprep.subr.mxu0 0.0
        %469 = vmatpush1.msra.mxu0 0.0
        %470 = vmatprep.subr.mxu0 0.0
        %471 = vmatpush1.msra.mxu0 0.0
        %472 = vmatprep.subr.mxu0 0.0
        %473 = vmatpush1.msra.mxu0 0.0
        %474 = vmatprep.mubr.f32.mxu0 0.0
        %475 = vmatmul.mubr.f32.gmra.mrb[0].mxu0 %v404
        %v476 = vpop.f32.mrb[0].mxu0
        %v477 = vadd.f32 0.0, %v476
        %v478 = vpop.f32.mrb[0].mxu0
        %479 = vdwg.mxu0
        %v480 = vadd.f32 %v400, %v477
        %vm481 = vcmask 25600
        %482 = vst.msk [vmem:[#allocation4] sm:$0x3] %vm481, %v480
        %483 = vst.msk [vmem:[#allocation2] sm:$0x3] %vm392, %v374
        // Predicated region
        $region45: #{tpu_custom_call.1} parent=31 // pred_check
          %p484 = pneg %p278
        $region46: #{tpu_custom_call.1} parent=31 // pred_check_branch
          %486 = sbr.rel (%p484) target = $region48
        $region47: #{tpu_custom_call.1} parent=31 // pred_region
          %v487 = vld [vmem:[#allocation4] sm:$0x3]
          %v488 = vld [vmem:[#allocation3] sm:$0x3]
          %v489 = vrcp.pop %v488
          %491 = vset.pattern.permute.xlu0 0
          %492 = vperm.xlu0 %491, %v489
          %v493 = vpop.permute.xlu0 %492
          %v495 = vmul.f32 %v487, %v493
          %496 = vst.msk [vmem:[%s270] sm:$0x3] %vm481, %v495
        $region48: #{tpu_custom_call.1} parent=31 // pred_fallthru
          _
        %s497 = sand.u32 %s136, 1
        %s498 = scalar_lea.sflag [#allocation8], %s497
        %s499 = sand.u32 %s136, 1
        %s500 = smul.addr %s499, 2
        %s501 = scalar_lea.vmem [#allocation11], %s500
        // Predicated region
        $region49: #{tpu_custom_call.1} parent=31 // pred_check
          %p502 = pneg %p146
        $region50: #{tpu_custom_call.1} parent=31 // pred_check_branch
          %504 = sbr.rel (%p502) target = $region52
        $region51: #{tpu_custom_call.1} parent=31 // pred_region
          %s506 = ssub.s32 32, 32
          %507 = vsyncadd %s498, %s506
          %s508 = sadd.s32 %s29, %s28
          %s509 = smul.addr %s508, 32
          %s510 = scalar_lea.hbm %s3, %s509
          %s512 = sshll.u32 %s501, 4
          %s513 = int_to_ptr.vmem [resolvable:$true] %s512
          %515 = dma.vmem_to_hbm [thread:$0]  %s513, 32, %s510, %s498
        $region52: #{tpu_custom_call.1} parent=31 // pred_fallthru
          _
      $region32: #{tpu_custom_call.1} parent=5 // pred_fallthru
        _
      %p516 = scmp.le.s32.totalorder 2, %s18
      // Predicated region
      $region53: #{tpu_custom_call.1} parent=5 // pred_check
        %p517 = pneg %p516
      $region54: #{tpu_custom_call.1} parent=5 // pred_check_branch
        %519 = sbr.rel (%p517) target = $region56
      $region55: #{tpu_custom_call.1} parent=5 // pred_region
        %s520 = ssub.s32 %s18, 2
        // Predicated region
        $region57: #{tpu_custom_call.1} parent=55 // pred_check
          %p521 = pneg %p152
        $region58: #{tpu_custom_call.1} parent=55 // pred_check_branch
          %523 = sbr.rel (%p521) target = $region60
        $region59: #{tpu_custom_call.1} parent=55 // pred_region
          %s524 = sand.u32 %s137, 1
          %s525 = scalar_lea.sflag [#allocation8], %s524
          %s526 = sand.u32 %s137, 1
          %s527 = smul.addr %s526, 2
          %s528 = scalar_lea.vmem [#allocation11], %s527
          %529 = dma.done %s525, 32
        $region60: #{tpu_custom_call.1} parent=55 // pred_fallthru
          _
      $region56: #{tpu_custom_call.1} parent=5 // pred_fallthru
        _
    $region6: #{tpu_custom_call.1} parent=1 // loop_footer
      %s22 = sadd.s32 1, %s18
    $region7: #{tpu_custom_call.1} parent=1 // loop_footer_branch
      %17 = sbr.rel target = $region3
    $region8: #{tpu_custom_call.1} parent=1 // loop_exit
      _
    %530 = vsyncpa [#allocation7], 1
    %s531 = scalar_lea.sflag [#allocation7], 1
    %532 = vsyncpa %s531, 1
    %533 = vsyncpa [#allocation10], 1
    %s534 = scalar_lea.sflag [#allocation10], 1
    %535 = vsyncpa %s534, 1
    %536 = vsyncpa [#allocation8], 1
    %s537 = scalar_lea.sflag [#allocation8], 1
    %538 = vsyncpa %s537, 1

</llo_original>
